<compile_context>
chip_gen: v6e
topology: v6e:2x2x1
jax: 0.10.0
libtpu: 0.0.40
codegen_flags: <defaults>
</compile_context>

<pallas_src>
import jax
import jax.numpy as jnp
from jax.experimental import pallas as pl
from jax.experimental.pallas import tpu as pltpu

# ---- config (mirrors the PyTorch `config` globals, small synthetic values) ----
OUT_DIM = 16
GCN_HIDDEN = 16
GCN_HIDDEN2 = 16
GCN_OUT = 16
DENSE_HIDDEN1 = 32
DENSE_HIDDEN2 = 16
ATTN_HIDDEN = 8


def _vmem_spec():
    return pl.BlockSpec(memory_space=pltpu.MemorySpace.VMEM)


def _tile(n, pref):
    """Use `pref` as a tile if it divides n, else fall back to the full extent."""
    return pref if (n >= pref and n % pref == 0) else n


# --------------------------------------------------------------------------
# Kernel 1: social attention, users blocked (parallel) x items tiled
#   (arbitrary, online softmax).  Input is the natural user-major (U, V, D)
#   gather — no HBM transpose pass (feedback #1).
#   Reference forward bug-for-bug: the inner python loop overwrites
#   social_embed2[u] with social_embed[u][last] * beta[last] broadcast over all
#   V rows, so sum over dim=1 == V * s[last] * beta[last].
# --------------------------------------------------------------------------
def social_attention(social, user_emb, w1, b1, w2, *, tu=128, tv=128):
    U, V, D = social.shape
    H = w1.shape[1]
    tu = _tile(U, tu)          # NOTE: tu, tv should be multiples of 8 for the
    tv = _tile(V, tv)          # free (tu, tv, D) -> (tu*tv, D) collapse.
    b1_row = b1.reshape(1, H)
    w2_row = w2.reshape(1, 1, H)     # (H, 1) -> lane vector
    # attn bias b2 is a constant added to every logit -> cancels under softmax
    # (dead parameter in the reference); dropped here (feedback #10).

    def kernel(s_ref, ue_ref, w1_ref, b1_ref, w2_ref, out_ref, m_ref, l_ref):
        j = pl.program_id(1)

        @pl.when(j == 0)
        def _():
            m_ref[...] = jnp.full(m_ref.shape, -jnp.inf, m_ref.dtype)
            l_ref[...] = jnp.zeros(l_ref.shape, l_ref.dtype)

        s = s_ref[...]                                            # (tu, tv, D)
        # Attention.project layer 1 as ONE flattened matmul (feedback #2).
        sflat = s.reshape(tu * tv, D)
        h = jnp.tanh(jnp.dot(sflat, w1_ref[...],
                             preferred_element_type=jnp.float32) + b1_ref[...])
        h = h.reshape(tu, tv, H)
        # layer 2 (H -> 1) as a VPU/XLU multiply-reduce (no 1-lane matmul)
        logits = jnp.sum(h * w2_ref[...], axis=-1)                # (tu, tv)

        # online softmax over the item axis (running max / denominator)
        m_prev = m_ref[...]
        m_new = jnp.maximum(m_prev, jnp.max(logits, axis=-1, keepdims=True))
        l_ref[...] = (l_ref[...] * jnp.exp(m_prev - m_new)
                      + jnp.sum(jnp.exp(logits - m_new), axis=-1, keepdims=True))
        m_ref[...] = m_new

        @pl.when(j == pl.num_programs(1) - 1)
        def _():
            beta_last = (jnp.exp(logits[:, tv - 1:tv] - m_ref[...])
                         * pl.reciprocal(l_ref[...], approx=True))   # (tu, 1)
            s_last = s[:, tv - 1, :]                                  # (tu, D)
            out_ref[...] = ue_ref[...] + jnp.float32(V) * s_last * beta_last

    return pl.pallas_call(
        kernel,
        out_shape=jax.ShapeDtypeStruct((U, D), jnp.float32),
        grid=(U // tu, V // tv),
        in_specs=[
            pl.BlockSpec((tu, tv, D), lambda i, j: (i, j, 0)),
            pl.BlockSpec((tu, D), lambda i, j: (i, 0)),
            pl.BlockSpec((D, H), lambda i, j: (0, 0)),
            pl.BlockSpec((1, H), lambda i, j: (0, 0)),
            pl.BlockSpec((1, 1, H), lambda i, j: (0, 0, 0)),
        ],
        out_specs=pl.BlockSpec((tu, D), lambda i, j: (i, 0)),
        scratch_shapes=[pltpu.VMEM((tu, 1), jnp.float32),
                        pltpu.VMEM((tu, 1), jnp.float32)],
        compiler_params=pltpu.CompilerParams(
            dimension_semantics=("parallel", "arbitrary")),
    )(social, user_emb, w1, b1_row, w2_row)


# --------------------------------------------------------------------------
# Kernel 2: fused 3-layer GCN stack + concat output.
#   out = [relu(A(XW0)+b0) | X | relu(A(h1 W1)+b1) | h1 | relu(A(h2 W2)+b2) | h2]
#   A_hat is read once, intermediates stay in VMEM, and the 96-wide concat is
#   written with a single dense store (feedback #6) instead of six 16-wide
#   column-slice stores.
# --------------------------------------------------------------------------
def gcn_stack_kernel(a_ref, x_ref, w0_ref, b0_ref, w1_ref, b1_ref, w2_ref, b2_ref,
                     out_ref):
    a = a_ref[...]
    x = x_ref[...]

    def layer(h, w_ref, b_ref):
        hw = jnp.dot(h, w_ref[...], preferred_element_type=jnp.float32)
        agg = jnp.dot(a, hw, preferred_element_type=jnp.float32)
        return jnp.maximum(agg + b_ref[...], 0.0)

    h1 = layer(x, w0_ref, b0_ref)
    h2 = layer(h1, w1_ref, b1_ref)
    h3 = layer(h2, w2_ref, b2_ref)
    # reference concat order: [out1 | input | out2 | out1 | out3 | out2]
    out_ref[...] = jnp.concatenate([h1, x, h2, h1, h3, h2], axis=1)


def gcn_stack(a_hat, x, w0, b0, w1, b1, w2, b2):
    n, dx = x.shape
    d_cat = 2 * w0.shape[1] + dx + 2 * w1.shape[1] + w2.shape[1]
    # TODO(synk): for large N the whole-A VMEM residency does not fit v7x
    # (64 MiB); the 3-hop dependency means a row-tiled variant needs per-layer
    # passes (A streamed 3x, row-parallel grid) and bf16 A storage — deferred
    # since graphs in this module are small.
    return pl.pallas_call(
        gcn_stack_kernel,
        out_shape=jax.ShapeDtypeStruct((n, d_cat), jnp.float32),
        in_specs=[_vmem_spec()] * 8,
        out_specs=_vmem_spec(),
    )(a_hat, x, w0, b0, w1, b1, w2, b2)


# --------------------------------------------------------------------------
# Kernel 3: dense head over all (user, item) pairs, blocked (tu x tv).
#   lin1(cat(eu_i, el_j)) == eu_i @ W1u + el_j @ W1v + b1 ; both halves are
#   hoisted and computed once in the wrapper.  Items live on the lane axis in
#   every intermediate.  lin2 is driven as one full-K MXU matmul per group of
#   8 users via a block-diagonal copy of W2^T (no per-user weight broadcast,
#   no M=16 matmuls — feedback #4); the H2->1 output projection is a VPU
#   multiply-reduce (feedback #3), so the block output is a dense (tu, tv)
#   tile of the (U, V) score matrix.
# --------------------------------------------------------------------------
def pair_mlp(eu, el, w1u, w1v, b1, w2, b2, w3, b3, *, tu=128, tv=512):
    U = eu.shape[0]
    V = el.shape[0]
    H1 = w1u.shape[1]
    H2 = w2.shape[1]
    tu = _tile(U, tu)
    tv = _tile(V, tv)
    group = 8 if tu % 8 == 0 else 1     # users folded into each MXU matmul

    # hoisted first-layer halves (computed once, not per grid step)
    hu = jnp.dot(eu, w1u)                               # (U, H1)
    hvt = (jnp.dot(el, w1v) + b1).T                     # (H1, V), b1 folded
    # block-diagonal copy of W2^T: turns `group` users' lin2 into a single
    # (group*H2, group*H1) @ (group*H1, tv) matmul with K = group*H1 (=256).
    w2_bd = jnp.kron(jnp.eye(group, dtype=jnp.float32), w2.T)
    b2_col = b2.reshape(H2, 1)
    w3_col = w3.reshape(H2, 1)
    b3_11 = b3.reshape(1, 1)

    def kernel(hu_ref, hvt_ref, wbd_ref, b2_ref, w3_ref, b3_ref, score_ref):
        # lin1: h1[u, k, v] = relu(hu[u, k] + hvt[k, v])  (items on lanes)
        h1 = jnp.maximum(hu_ref[...][:, :, None] + hvt_ref[...][None, :, :],
                         0.0)                                     # (tu, H1, tv)
        h1_2d = h1.reshape(tu * H1, tv)           # leading-dim collapse (H1 % 8 == 0)
        b2_3 = b2_ref[...][None, :, :]            # (1, H2, 1)
        w3_3 = w3_ref[...][None, :, :]            # (1, H2, 1)
        parts = []
        for g in range(tu // group):              # static unroll (<= 16 iters)
            blk = h1_2d[g * group * H1:(g + 1) * group * H1, :]   # (group*H1, tv)
            z = jnp.dot(wbd_ref[...], blk,
                        preferred_element_type=jnp.float32)       # (group*H2, tv)
            z = jnp.maximum(z.reshape(group, H2, tv) + b2_3, 0.0)
            parts.append(jnp.sum(z * w3_3, axis=1))               # (group, tv) on VPU
        s = jnp.concatenate(parts, axis=0) if len(parts) > 1 else parts[0]
        # reference applies ReLU on the output layer: score = relu(out(x))
        score_ref[...] = jnp.maximum(s + b3_ref[...], 0.0)        # (tu, tv)

    return pl.pallas_call(
        kernel,
        out_shape=jax.ShapeDtypeStruct((U, V), jnp.float32),
        grid=(U // tu, V // tv),
        in_specs=[
            pl.BlockSpec((tu, H1), lambda i, j: (i, 0)),
            pl.BlockSpec((H1, tv), lambda i, j: (0, j)),
            pl.BlockSpec((group * H2, group * H1), lambda i, j: (0, 0)),
            pl.BlockSpec((H2, 1), lambda i, j: (0, 0)),
            pl.BlockSpec((H2, 1), lambda i, j: (0, 0)),
            pl.BlockSpec((1, 1), lambda i, j: (0, 0)),
        ],
        out_specs=pl.BlockSpec((tu, tv), lambda i, j: (i, j)),
        compiler_params=pltpu.CompilerParams(
            dimension_semantics=("parallel", "parallel")),
    )(hu, hvt, w2_bd, b2_col, w3_col, b3_11)


# --------------------------------------------------------------------------
# Glue: params, GCN adjacency normalization, full forward.
# --------------------------------------------------------------------------
def normalized_adjacency(edge_index, n):
    """GCNConv-style D^{-1/2} (A + I) D^{-1/2} as a dense matrix."""
    a = jnp.zeros((n, n), jnp.float32)
    a = a.at[edge_index[0], edge_index[1]].set(1.0)
    a = a + jnp.eye(n, dtype=jnp.float32)
    deg = jnp.sum(a, axis=1)
    d_inv_sqrt = jnp.where(deg > 0, 1.0 / jnp.sqrt(deg), 0.0)
    return d_inv_sqrt[:, None] * a * d_inv_sqrt[None, :]


def init_params(key, uv_vocab, user_vocab, item_vocab):
    keys = jax.random.split(key, 20)

    def nrm(k, shape, scale=0.1):
        return scale * jax.random.normal(k, shape, jnp.float32)

    p = {}
    p["user_embed"] = nrm(keys[0], (user_vocab, OUT_DIM))
    p["item_embed"] = nrm(keys[1], (item_vocab, OUT_DIM))
    p["ui_embed"] = nrm(keys[2], (uv_vocab, OUT_DIM))
    # attention MLP (attn_b2 kept for parameter parity; it cancels under softmax)
    p["attn_w1"] = nrm(keys[3], (OUT_DIM, ATTN_HIDDEN))
    p["attn_b1"] = nrm(keys[4], (1, ATTN_HIDDEN))
    p["attn_w2"] = nrm(keys[5], (ATTN_HIDDEN, 1))
    p["attn_b2"] = nrm(keys[6], (1, 1))
    # user / item GCN stacks
    dims = [(OUT_DIM, GCN_HIDDEN), (GCN_HIDDEN, GCN_HIDDEN2), (GCN_HIDDEN2, GCN_OUT)]
    for prefix, koff in (("ugcn", 7), ("igcn", 10)):
        for li, (din, dout) in enumerate(dims):
            k = jax.random.fold_in(keys[koff], li)
            ka, kb = jax.random.split(k)
            p[f"{prefix}_w{li}"] = nrm(ka, (din, dout))
            p[f"{prefix}_b{li}"] = nrm(kb, (1, dout))
    d_total = OUT_DIM + 2 * GCN_HIDDEN + 2 * GCN_HIDDEN2 + GCN_OUT
    p["lin1_w"] = nrm(keys[13], (2 * d_total, DENSE_HIDDEN1))
    p["lin1_b"] = nrm(keys[14], (1, DENSE_HIDDEN1))
    p["lin2_w"] = nrm(keys[15], (DENSE_HIDDEN1, DENSE_HIDDEN2))
    p["lin2_b"] = nrm(keys[16], (1, DENSE_HIDDEN2))
    p["out_w"] = nrm(keys[17], (DENSE_HIDDEN2, 1))
    p["out_b"] = nrm(keys[18], (1, 1))
    return p


def fgcf_forward(params, u_v_tensor1d, user_tensor1d, item_tensor1d,
                 ug_u_u2, ug_v_v2, user_num, item_num, *, attn_item_tile=128):
    # embedding lookups (glue) — natural user-major order, no transpose pass
    user_emb = params["user_embed"][user_tensor1d]                 # (U, D)
    poi_emb = params["item_embed"][item_tensor1d]                  # (V, D)
    social = params["ui_embed"][u_v_tensor1d].reshape(
        user_num, item_num, OUT_DIM)                               # (U, V, D)

    # attention + aggregation + residual with user embedding (Pallas)
    social2d = social_attention(social, user_emb,
                                params["attn_w1"], params["attn_b1"],
                                params["attn_w2"],
                                tv=attn_item_tile)                 # (U, D)

    a_u = normalized_adjacency(ug_u_u2, user_num)
    a_v = normalized_adjacency(ug_v_v2, item_num)

    # TODO(synk): F.dropout(p=0.3) after each ReLU is stochastic in the
    # reference; treated as identity (inference) here.
    eu = gcn_stack(a_u, social2d,
                   params["ugcn_w0"], params["ugcn_b0"],
                   params["ugcn_w1"], params["ugcn_b1"],
                   params["ugcn_w2"], params["ugcn_b2"])           # (U, Dt)
    el = gcn_stack(a_v, poi_emb,
                   params["igcn_w0"], params["igcn_b0"],
                   params["igcn_w1"], params["igcn_b1"],
                   params["igcn_w2"], params["igcn_b2"])           # (V, Dt)

    d_total = eu.shape[1]
    w1u = params["lin1_w"][:d_total]
    w1v = params["lin1_w"][d_total:]
    score = pair_mlp(eu, el, w1u, w1v, params["lin1_b"],
                     params["lin2_w"], params["lin2_b"],
                     params["out_w"], params["out_b"])             # (U, V)
    return score, eu, el


if __name__ == "__main__":
    # small, TPU-friendly shapes (multiples of 8 so in-kernel leading-dim
    # collapses stay layout-preserving); item tile 8 exercises the online
    # softmax over 2 item tiles.
    user_num, item_num = 8, 16

    u_v_tensor1d = jnp.arange(user_num * item_num, dtype=jnp.int32)   # (128,)
    user_tensor1d = jnp.arange(user_num, dtype=jnp.int32)             # (8,)
    item_tensor1d = jnp.arange(item_num, dtype=jnp.int32)             # (16,)

    def ring_edges(n):
        src = jnp.arange(n, dtype=jnp.int32)
        dst = (src + 1) % n
        return jnp.stack([jnp.concatenate([src, dst]),
                          jnp.concatenate([dst, src])])               # (2, 2n)

    ug_u_u2 = ring_edges(user_num)
    ug_v_v2 = ring_edges(item_num)

    params = init_params(jax.random.PRNGKey(0),
                         uv_vocab=user_num * item_num,
                         user_vocab=user_num,
                         item_vocab=item_num)

    score, eu, el = fgcf_forward(params, u_v_tensor1d, user_tensor1d,
                                 item_tensor1d, ug_u_u2, ug_v_v2,
                                 user_num, item_num, attn_item_tile=8)
    jax.block_until_ready((score, eu, el))

    d_total = OUT_DIM + 2 * GCN_HIDDEN + 2 * GCN_HIDDEN2 + GCN_OUT
    assert score.shape == (user_num, item_num)
    assert eu.shape == (user_num, d_total)
    assert el.shape == (item_num, d_total)
    print("KERNEL_OK")
</pallas_src>

<mosaic_0001>
module attributes {stable_mosaic.version = 11 : i64} {
  func.func @kernel(%arg0: i32, %arg1: i32, %arg2: memref<8x8x16xf32, #tpu.memory_space<vmem>>, %arg3: memref<8x16xf32, #tpu.memory_space<vmem>>, %arg4: memref<16x8xf32, #tpu.memory_space<vmem>>, %arg5: memref<1x8xf32, #tpu.memory_space<vmem>>, %arg6: memref<1x1x8xf32, #tpu.memory_space<vmem>>, %arg7: memref<8x16xf32, #tpu.memory_space<vmem>>, %arg8: memref<8x1xf32, #tpu.memory_space<vmem>>, %arg9: memref<8x1xf32, #tpu.memory_space<vmem>>) attributes {dimension_semantics = [#tpu.dimension_semantics<parallel>, #tpu.dimension_semantics<arbitrary>], iteration_bounds = array<i64: 1, 2>, scalar_prefetch = 0 : i64, scratch_operands = 2 : i64, tpu.core_type = #tpu.core_type<tc>, window_params = [{transform_indices = @transform_0, window_bounds = array<i64: 8, 8, 16>}, {transform_indices = @transform_1, window_bounds = array<i64: 8, 16>}, {pipeline_mode = #tpu.pipeline_mode<synchronous>, transform_indices = @transform_2, window_bounds = array<i64: 16, 8>}, {pipeline_mode = #tpu.pipeline_mode<synchronous>, transform_indices = @transform_3, window_bounds = array<i64: 1, 8>}, {pipeline_mode = #tpu.pipeline_mode<synchronous>, transform_indices = @transform_4, window_bounds = array<i64: 1, 1, 8>}, {transform_indices = @transform_5, window_bounds = array<i64: 8, 16>}]} {
    %c0_i32 = arith.constant 0 : i32
    %0 = arith.cmpi eq, %arg1, %c0_i32 : i32
    %1 = arith.extui %0 : i1 to i32
    %c0_i32_0 = arith.constant 0 : i32
    %2 = arith.cmpi ne, %1, %c0_i32_0 : i32
    scf.if %2 {
      %cst_22 = arith.constant 0xFF800000 : f32
      %35 = vector.broadcast %cst_22 : f32 to vector<8x1xf32>
      %c0_23 = arith.constant 0 : index
      %c0_24 = arith.constant 0 : index
      %36 = vector.load %arg8[%c0_23, %c0_24] : memref<8x1xf32, #tpu.memory_space<vmem>>, vector<8x1xf32>
      tpu.vector_store %arg8[%c0_23, %c0_24], %35 {strides = array<i32>} : memref<8x1xf32, #tpu.memory_space<vmem>>, vector<8x1xf32>,
      %cst_25 = arith.constant 0.000000e+00 : f32
      %37 = vector.broadcast %cst_25 : f32 to vector<8x1xf32>
      %c0_26 = arith.constant 0 : index
      %c0_27 = arith.constant 0 : index
      %38 = vector.load %arg9[%c0_26, %c0_27] : memref<8x1xf32, #tpu.memory_space<vmem>>, vector<8x1xf32>
      tpu.vector_store %arg9[%c0_26, %c0_27], %37 {strides = array<i32>} : memref<8x1xf32, #tpu.memory_space<vmem>>, vector<8x1xf32>,
    } else {
    }
    %c0 = arith.constant 0 : index
    %c0_1 = arith.constant 0 : index
    %c0_2 = arith.constant 0 : index
    %3 = vector.load %arg2[%c0, %c0_1, %c0_2] : memref<8x8x16xf32, #tpu.memory_space<vmem>>, vector<8x8x16xf32>
    %4 = vector.shape_cast %3 : vector<8x8x16xf32> to vector<64x16xf32>
    %c0_3 = arith.constant 0 : index
    %c0_4 = arith.constant 0 : index
    %5 = vector.load %arg4[%c0_3, %c0_4] : memref<16x8xf32, #tpu.memory_space<vmem>>, vector<16x8xf32>
    %cst = arith.constant dense<0.000000e+00> : vector<64x8xf32>
    %6 = tpu.matmul %4, %5, %cst {dimension_numbers = #tpu.dot_dimension_numbers<[1], [0], [0], [1], [0, 0, 1, 1], [], []>} : vector<64x16xf32>, vector<16x8xf32>, vector<64x8xf32> -> vector<64x8xf32>
    %c0_5 = arith.constant 0 : index
    %c0_6 = arith.constant 0 : index
    %7 = vector.load %arg5[%c0_5, %c0_6] : memref<1x8xf32, #tpu.memory_space<vmem>>, vector<1x8xf32>
    %8 = vector.broadcast %7 : vector<1x8xf32> to vector<64x8xf32>
    %9 = arith.addf %6, %8 : vector<64x8xf32>
    %10 = math.tanh %9 : vector<64x8xf32>
    %11 = vector.shape_cast %10 : vector<64x8xf32> to vector<8x8x8xf32>
    %c0_7 = arith.constant 0 : index
    %c0_8 = arith.constant 0 : index
    %c0_9 = arith.constant 0 : index
    %12 = vector.load %arg6[%c0_7, %c0_8, %c0_9] : memref<1x1x8xf32, #tpu.memory_space<vmem>>, vector<1x1x8xf32>
    %13 = vector.broadcast %12 : vector<1x1x8xf32> to vector<8x8x8xf32>
    %14 = arith.mulf %11, %13 : vector<8x8x8xf32>
    %cst_10 = arith.constant dense<0.000000e+00> : vector<8x8xf32>
    %15 = vector.multi_reduction <add>, %14, %cst_10 [2] : vector<8x8x8xf32> to vector<8x8xf32>
    %c0_11 = arith.constant 0 : index
    %c0_12 = arith.constant 0 : index
    %16 = vector.load %arg8[%c0_11, %c0_12] : memref<8x1xf32, #tpu.memory_space<vmem>>, vector<8x1xf32>
    %cst_13 = arith.constant dense<0xFF800000> : vector<8xf32>
    %17 = vector.multi_reduction <maximumf>, %15, %cst_13 [1] : vector<8x8xf32> to vector<8xf32>
    %18 = vector.shape_cast %17 : vector<8xf32> to vector<8x1xf32>
    %19 = arith.maximumf %16, %18 : vector<8x1xf32>
    %c0_14 = arith.constant 0 : index
    %c0_15 = arith.constant 0 : index
    %20 = vector.load %arg9[%c0_14, %c0_15] : memref<8x1xf32, #tpu.memory_space<vmem>>, vector<8x1xf32>
    %21 = arith.subf %16, %19 : vector<8x1xf32>
    %22 = math.exp %21 : vector<8x1xf32>
    %23 = arith.mulf %20, %22 : vector<8x1xf32>
    %24 = vector.broadcast %19 : vector<8x1xf32> to vector<8x8xf32>
    %25 = arith.subf %15, %24 : vector<8x8xf32>
    %26 = math.exp %25 : vector<8x8xf32>
    %cst_16 = arith.constant dense<0.000000e+00> : vector<8xf32>
    %27 = vector.multi_reduction <add>, %26, %cst_16 [1] : vector<8x8xf32> to vector<8xf32>
    %28 = vector.shape_cast %27 : vector<8xf32> to vector<8x1xf32>
    %29 = arith.addf %23, %28 : vector<8x1xf32>
    %c0_17 = arith.constant 0 : index
    %c0_18 = arith.constant 0 : index
    %30 = vector.load %arg9[%c0_17, %c0_18] : memref<8x1xf32, #tpu.memory_space<vmem>>, vector<8x1xf32>
    tpu.vector_store %arg9[%c0_17, %c0_18], %29 {strides = array<i32>} : memref<8x1xf32, #tpu.memory_space<vmem>>, vector<8x1xf32>,
    %c0_19 = arith.constant 0 : index
    %c0_20 = arith.constant 0 : index
    %31 = vector.load %arg8[%c0_19, %c0_20] : memref<8x1xf32, #tpu.memory_space<vmem>>, vector<8x1xf32>
    tpu.vector_store %arg8[%c0_19, %c0_20], %19 {strides = array<i32>} : memref<8x1xf32, #tpu.memory_space<vmem>>, vector<8x1xf32>,
    %c1_i32 = arith.constant 1 : i32
    %32 = arith.cmpi eq, %arg1, %c1_i32 : i32
    %33 = arith.extui %32 : i1 to i32
    %c0_i32_21 = arith.constant 0 : i32
    %34 = arith.cmpi ne, %33, %c0_i32_21 : i32
    scf.if %34 {
      %35 = vector.extract_strided_slice %15 {offsets = [0, 7], sizes = [8, 1], strides = [1, 1]} : vector<8x8xf32> to vector<8x1xf32>
      %c0_22 = arith.constant 0 : index
      %c0_23 = arith.constant 0 : index
      %36 = vector.load %arg8[%c0_22, %c0_23] : memref<8x1xf32, #tpu.memory_space<vmem>>, vector<8x1xf32>
      %37 = arith.subf %35, %36 : vector<8x1xf32>
      %38 = math.exp %37 : vector<8x1xf32>
      %c0_24 = arith.constant 0 : index
      %c0_25 = arith.constant 0 : index
      %39 = vector.load %arg9[%c0_24, %c0_25] : memref<8x1xf32, #tpu.memory_space<vmem>>, vector<8x1xf32>
      %40 = tpu.reciprocal %39 {approx = true} : vector<8x1xf32> -> vector<8x1xf32>
      %41 = arith.mulf %38, %40 : vector<8x1xf32>
      %42 = vector.extract_strided_slice %3 {offsets = [0, 7, 0], sizes = [8, 1, 16], strides = [1, 1, 1]} : vector<8x8x16xf32> to vector<8x1x16xf32>
      %43 = vector.shape_cast %42 : vector<8x1x16xf32> to vector<8x16xf32>
      %c0_26 = arith.constant 0 : index
      %c0_27 = arith.constant 0 : index
      %44 = vector.load %arg3[%c0_26, %c0_27] : memref<8x16xf32, #tpu.memory_space<vmem>>, vector<8x16xf32>
      %cst_28 = arith.constant 1.600000e+01 : f32
      %45 = vector.broadcast %cst_28 : f32 to vector<8x16xf32>
      %46 = arith.mulf %45, %43 : vector<8x16xf32>
      %47 = vector.broadcast %41 : vector<8x1xf32> to vector<8x16xf32>
      %48 = arith.mulf %46, %47 : vector<8x16xf32>
      %49 = arith.addf %44, %48 : vector<8x16xf32>
      %c0_29 = arith.constant 0 : index
      %c0_30 = arith.constant 0 : index
      %50 = vector.load %arg7[%c0_29, %c0_30] : memref<8x16xf32, #tpu.memory_space<vmem>>, vector<8x16xf32>
      tpu.vector_store %arg7[%c0_29, %c0_30], %49 {strides = array<i32>} : memref<8x16xf32, #tpu.memory_space<vmem>>, vector<8x16xf32>,
    } else {
    }
    return
  }
  func.func @transform_0(%arg0: i32, %arg1: i32) -> (i32, i32, i32) {
    %c0_i32 = arith.constant 0 : i32
    %c0_i32_0 = arith.constant 0 : i32
    return %arg0, %arg1, %c0_i32 : i32, i32, i32
  }
  func.func @transform_1(%arg0: i32, %arg1: i32) -> (i32, i32) {
    %c0_i32 = arith.constant 0 : i32
    %c0_i32_0 = arith.constant 0 : i32
    return %arg0, %c0_i32 : i32, i32
  }
  func.func @transform_2(%arg0: i32, %arg1: i32) -> (i32, i32) {
    %c0_i32 = arith.constant 0 : i32
    %c0_i32_0 = arith.constant 0 : i32
    %c0_i32_1 = arith.constant 0 : i32
    return %c0_i32, %c0_i32_0 : i32, i32
  }
  func.func @transform_3(%arg0: i32, %arg1: i32) -> (i32, i32) {
    %c0_i32 = arith.constant 0 : i32
    %c0_i32_0 = arith.constant 0 : i32
    %c0_i32_1 = arith.constant 0 : i32
    return %c0_i32, %c0_i32_0 : i32, i32
  }
  func.func @transform_4(%arg0: i32, %arg1: i32) -> (i32, i32, i32) {
    %c0_i32 = arith.constant 0 : i32
    %c0_i32_0 = arith.constant 0 : i32
    %c0_i32_1 = arith.constant 0 : i32
    %c0_i32_2 = arith.constant 0 : i32
    return %c0_i32, %c0_i32_0, %c0_i32_1 : i32, i32, i32
  }
  func.func @transform_5(%arg0: i32, %arg1: i32) -> (i32, i32) {
    %c0_i32 = arith.constant 0 : i32
    %c0_i32_0 = arith.constant 0 : i32
    return %arg0, %c0_i32 : i32, i32
  }
}

</mosaic_0001>

<llo_original>
// kernel: tpu_custom_call.1
$region0: #{tpu_custom_call.1}
  #allocation0 [shape = 'u32[]', space=smem, size = 0x4, offset = 0x4, fixed_abs, tag = 'smem constant byte address 0x4 - core index']
  #allocation1 [shape = 'u32[144,128]{1,0:T(1,128)}', space=vmem, size = 0x12000, scoped, tag = 'internal scratch']
  #allocation2 [shape = 'f32[8,1]{1,0:T(8,128)}', space=vmem, size = 0x1000, scoped, tag = 'scratch operand']
  #allocation3 [shape = 'f32[8,1]{1,0:T(8,128)}', space=vmem, size = 0x1000, scoped, tag = 'scratch operand']
  %s0 = inlined_call_operand.hbm [shape: f32[8,16,16], index: 0, kind: input, shape index: {}]
  %s1 = inlined_call_operand.vmem [shape: f32[8,16], index: 1, kind: input, shape index: {}]
  %s2 = inlined_call_operand.vmem [shape: f32[16,8], index: 2, kind: input, shape index: {}]
  %s3 = inlined_call_operand.vmem [shape: f32[1,8], index: 3, kind: input, shape index: {}]
  %s4 = inlined_call_operand.vmem [shape: f32[1,1,8], index: 4, kind: input, shape index: {}]
  %s5 = inlined_call_operand.hbm [shape: f32[8,16], index: 5, kind: output, shape index: {}]
  %s6 = sld [smem:[#allocation0]]
  $region65: #{tpu_custom_call.1} parent=0
    _
  %s8 = ssub.s32 1, %s6
  %s9 = scalar_select 0, %s8, %s6
  $region1: #{tpu_custom_call.1} parent=0
    #allocation4 [shape = 'u8[65536]{0}', space=vmem, size = 0x10000, scoped, tag = 'input window, operand 0']
    #allocation5 [shape = 's32[2]{0}', space=sflag, size = 0x8, scoped, tag = 'scoped memory for tpu_custom_call.1']
    #allocation6 [shape = 's32[2]{0}', space=sflag, size = 0x8, scoped, tag = 'scoped memory for tpu_custom_call.1']
    #allocation7 [shape = 'u8[4096]{0}', space=vmem, size = 0x1000, scoped, tag = 'output window, operand 0, single buffered']
    %10 = vsyncpa [#allocation5], 0
    %s11 = scalar_lea.sflag [#allocation5], 1
    %12 = vsyncpa %s11, 0
    %13 = vsyncpa [#allocation6], 0
    loop: start=0, step=1, limit=4
    $region2: #{tpu_custom_call.1} parent=1 // loop_pre_header
      _
    $region3: #{tpu_custom_call.1} parent=1 // loop_header
      %s15 = sphi 0, %s19
      %p16 = scmp.ge.s32.totalorder %s15, 4
      %s22 = sphi 0, %s34
      %s23 = sphi 0, %s30
      %s24 = sphi 0, %s22
      %s25 = sphi 0, %s23
      %s26 = sphi 0, %s24
      %s27 = sphi 0, %s25
      %s39 = sphi 0, %s41
      %s42 = sphi 0, %s39
      %s43 = sphi 0, %s42
      %s59 = sphi 0, %s43
      %s65 = sphi 0, %s67
      %s68 = sphi 0, %s65
      %s69 = sphi 0, %s68
      %s85 = sphi 0, %s69
      %s89 = sphi 0, %s89
      %s91 = sphi 0, %s89
      %s92 = sphi 0, %s91
      %s106 = sphi 0, %s92
      %s110 = sphi 0, %s110
      %s112 = sphi 0, %s110
      %s113 = sphi 0, %s112
      %s127 = sphi 0, %s113
      %s131 = sphi 0, %s131
      %s133 = sphi 0, %s131
      %s134 = sphi 0, %s133
      %s148 = sphi 0, %s134
      %s154 = sphi 0, %s156
      %s157 = sphi 0, %s154
      %s158 = sphi 0, %s157
      %s174 = sphi 0, %s158
    $region4: #{tpu_custom_call.1} parent=1 // loop_header_branch
      %18 = sbr.rel (%p16) target = $region8
    $region5: #{tpu_custom_call.1} parent=1 // loop_body
      %s20 = ssub.s32 %s15, 1
      %s21 = ssub.s32 %s15, 2
      %s28 = sadd.s32 1, %s23
      %p29 = scmp.ge.s32.totalorder %s28, 2
      %s30 = scalar_select %p29, 0, %s28
      %s31 = sadd.s32 1, %s22
      %s32 = scalar_select %p29, %s31, %s22
      %p33 = scmp.ge.s32.totalorder %s32, 1
      %s34 = scalar_select %p33, 0, %s32
      %s35 = ssub.s32 %s22, %s34
      %s36 = ssub.s32 %s23, %s30
      %s37 = sor.u32 %s35, %s36
      %p38 = scmp.eq.s32.totalorder %s37, 0
      %s40 = sadd.s32 %s39, 1
      %s41 = scalar_select %p38, %s39, %s40
      %p44 = pneg %p38
      %p45 = scmp.eq.s32.totalorder %s15, 1
      %p46 = por %p44, %p45
      %p47 = scmp.ne.s32.totalorder %s39, %s42
      %p48 = scmp.eq.s32.totalorder %s15, 0
      %p49 = por %p47, %p48
      %p50 = scmp.ne.s32.totalorder %s39, %s42
      %p51 = scmp.eq.s32.totalorder %s20, 1
      %p52 = por %p50, %p51
      %p53 = scmp.ne.s32.totalorder %s42, %s43
      %p54 = scmp.eq.s32.totalorder %s20, 0
      %p55 = por %p53, %p54
      %p56 = scmp.ne.s32.totalorder %s42, %s43
      %p57 = scmp.eq.s32.totalorder %s21, 1
      %p58 = por %p56, %p57
      %p60 = scmp.ne.s32.totalorder %s43, %s59
      %p61 = scmp.eq.s32.totalorder %s21, 0
      %p62 = por %p60, %p61
      %s63 = ssub.s32 %s22, %s34
      %p64 = scmp.eq.s32.totalorder %s63, 0
      %s66 = sadd.s32 %s65, 1
      %s67 = scalar_select %p64, %s65, %s66
      %p70 = pneg %p64
      %p71 = scmp.eq.s32.totalorder %s15, 1
      %p72 = por %p70, %p71
      %p73 = scmp.ne.s32.totalorder %s65, %s68
      %p74 = scmp.eq.s32.totalorder %s15, 0
      %p75 = por %p73, %p74
      %p76 = scmp.ne.s32.totalorder %s65, %s68
      %p77 = scmp.eq.s32.totalorder %s20, 1
      %p78 = por %p76, %p77
      %p79 = scmp.ne.s32.totalorder %s68, %s69
      %p80 = scmp.eq.s32.totalorder %s20, 0
      %p81 = por %p79, %p80
      %p82 = scmp.ne.s32.totalorder %s68, %s69
      %p83 = scmp.eq.s32.totalorder %s21, 1
      %p84 = por %p82, %p83
      %p86 = scmp.ne.s32.totalorder %s69, %s85
      %p87 = scmp.eq.s32.totalorder %s21, 0
      %p88 = por %p86, %p87
      %s90 = sadd.s32 %s89, 1
      %p93 = scmp.eq.s32.totalorder %s15, 1
      %p94 = scmp.ne.s32.totalorder %s89, %s91
      %p95 = scmp.eq.s32.totalorder %s15, 0
      %p96 = por %p94, %p95
      %p97 = scmp.ne.s32.totalorder %s89, %s91
      %p98 = scmp.eq.s32.totalorder %s20, 1
      %p99 = por %p97, %p98
      %p100 = scmp.ne.s32.totalorder %s91, %s92
      %p101 = scmp.eq.s32.totalorder %s20, 0
      %p102 = por %p100, %p101
      %p103 = scmp.ne.s32.totalorder %s91, %s92
      %p104 = scmp.eq.s32.totalorder %s21, 1
      %p105 = por %p103, %p104
      %p107 = scmp.ne.s32.totalorder %s92, %s106
      %p108 = scmp.eq.s32.totalorder %s21, 0
      %p109 = por %p107, %p108
      %s111 = sadd.s32 %s110, 1
      %p114 = scmp.eq.s32.totalorder %s15, 1
      %p115 = scmp.ne.s32.totalorder %s110, %s112
      %p116 = scmp.eq.s32.totalorder %s15, 0
      %p117 = por %p115, %p116
      %p118 = scmp.ne.s32.totalorder %s110, %s112
      %p119 = scmp.eq.s32.totalorder %s20, 1
      %p120 = por %p118, %p119
      %p121 = scmp.ne.s32.totalorder %s112, %s113
      %p122 = scmp.eq.s32.totalorder %s20, 0
      %p123 = por %p121, %p122
      %p124 = scmp.ne.s32.totalorder %s112, %s113
      %p125 = scmp.eq.s32.totalorder %s21, 1
      %p126 = por %p124, %p125
      %p128 = scmp.ne.s32.totalorder %s113, %s127
      %p129 = scmp.eq.s32.totalorder %s21, 0
      %p130 = por %p128, %p129
      %s132 = sadd.s32 %s131, 1
      %p135 = scmp.eq.s32.totalorder %s15, 1
      %p136 = scmp.ne.s32.totalorder %s131, %s133
      %p137 = scmp.eq.s32.totalorder %s15, 0
      %p138 = por %p136, %p137
      %p139 = scmp.ne.s32.totalorder %s131, %s133
      %p140 = scmp.eq.s32.totalorder %s20, 1
      %p141 = por %p139, %p140
      %p142 = scmp.ne.s32.totalorder %s133, %s134
      %p143 = scmp.eq.s32.totalorder %s20, 0
      %p144 = por %p142, %p143
      %p145 = scmp.ne.s32.totalorder %s133, %s134
      %p146 = scmp.eq.s32.totalorder %s21, 1
      %p147 = por %p145, %p146
      %p149 = scmp.ne.s32.totalorder %s134, %s148
      %p150 = scmp.eq.s32.totalorder %s21, 0
      %p151 = por %p149, %p150
      %s152 = ssub.s32 %s22, %s34
      %p153 = scmp.eq.s32.totalorder %s152, 0
      %s155 = sadd.s32 %s154, 1
      %s156 = scalar_select %p153, %s154, %s155
      %p159 = pneg %p153
      %p160 = scmp.eq.s32.totalorder %s15, 1
      %p161 = por %p159, %p160
      %p162 = scmp.ne.s32.totalorder %s154, %s157
      %p163 = scmp.eq.s32.totalorder %s15, 0
      %p164 = por %p162, %p163
      %p165 = scmp.ne.s32.totalorder %s154, %s157
      %p166 = scmp.eq.s32.totalorder %s20, 1
      %p167 = por %p165, %p166
      %p168 = scmp.ne.s32.totalorder %s157, %s158
      %p169 = scmp.eq.s32.totalorder %s20, 0
      %p170 = por %p168, %p169
      %p171 = scmp.ne.s32.totalorder %s157, %s158
      %p172 = scmp.eq.s32.totalorder %s21, 1
      %p173 = por %p171, %p172
      %p175 = scmp.ne.s32.totalorder %s158, %s174
      %p176 = scmp.eq.s32.totalorder %s21, 0
      %p177 = por %p175, %p176
      %p178 = scmp.le.s32.totalorder 1, %s15
      %p179 = scmp.lt.s32.totalorder %s15, 3
      %p180 = pnand %p178, %p179
      %p181 = pneg %p180
      // Predicated region
      $region9: #{tpu_custom_call.1} parent=5 // pred_check
        _
      $region10: #{tpu_custom_call.1} parent=5 // pred_check_branch
        %183 = sbr.rel (%p180) target = $region12
      $region11: #{tpu_custom_call.1} parent=5 // pred_region
        %s184 = ssub.s32 %s15, 1
        // Predicated region
        $region13: #{tpu_custom_call.1} parent=11 // pred_check
          %p185 = pneg %p81
        $region14: #{tpu_custom_call.1} parent=11 // pred_check_branch
          %187 = sbr.rel (%p185) target = $region16
        $region15: #{tpu_custom_call.1} parent=11 // pred_region
          %p188 = scmp.lt.s32.totalorder %s24, 0
          %s189 = scalar_select %p188, %s24, 0
          %s190 = smul.addr %s189, 8
          %s191 = scalar_lea.vmem %s1, %s190
        $region16: #{tpu_custom_call.1} parent=11 // pred_fallthru
          _
        // Predicated region
        $region17: #{tpu_custom_call.1} parent=11 // pred_check
          %p192 = pneg %p102
        $region18: #{tpu_custom_call.1} parent=11 // pred_check_branch
          %194 = sbr.rel (%p192) target = $region20
        $region19: #{tpu_custom_call.1} parent=11 // pred_region
          _
        $region20: #{tpu_custom_call.1} parent=11 // pred_fallthru
          _
        // Predicated region
        $region21: #{tpu_custom_call.1} parent=11 // pred_check
          %p195 = pneg %p123
        $region22: #{tpu_custom_call.1} parent=11 // pred_check_branch
          %197 = sbr.rel (%p195) target = $region24
        $region23: #{tpu_custom_call.1} parent=11 // pred_region
          _
        $region24: #{tpu_custom_call.1} parent=11 // pred_fallthru
          _
        // Predicated region
        $region25: #{tpu_custom_call.1} parent=11 // pred_check
          %p198 = pneg %p144
        $region26: #{tpu_custom_call.1} parent=11 // pred_check_branch
          %200 = sbr.rel (%p198) target = $region28
        $region27: #{tpu_custom_call.1} parent=11 // pred_region
          _
        $region28: #{tpu_custom_call.1} parent=11 // pred_fallthru
          _
      $region12: #{tpu_custom_call.1} parent=5 // pred_fallthru
        _
      %p201 = scmp.lt.s32.totalorder %s15, 2
      // Predicated region
      $region29: #{tpu_custom_call.1} parent=5 // pred_check
        %p202 = pneg %p201
      $region30: #{tpu_custom_call.1} parent=5 // pred_check_branch
        %204 = sbr.rel (%p202) target = $region32
      $region31: #{tpu_custom_call.1} parent=5 // pred_region
        // Predicated region
        $region33: #{tpu_custom_call.1} parent=31 // pred_check
          %p205 = pneg %p49
        $region34: #{tpu_custom_call.1} parent=31 // pred_check_branch
          %207 = sbr.rel (%p205) target = $region36
        $region35: #{tpu_custom_call.1} parent=31 // pred_region
          %s208 = sand.u32 %s39, 1
          %s209 = scalar_lea.sflag [#allocation5], %s208
          %s210 = sand.u32 %s39, 1
          %s211 = smul.addr %s210, 64
          %s212 = scalar_lea.vmem [#allocation4], %s211
          %s213 = smul.u32 8, %s22
          %s215 = ssub.s32 1024, 1024
          %216 = vsyncadd %s209, %s215
          %s217 = smul.addr %s213, 2
          %s218 = sadd.s32 %s23, %s217
          %s219 = smul.addr %s218, 128
          %s220 = scalar_lea.hbm %s0, %s219
          %s221 = sshll.u32 %s212, 4
          %s222 = int_to_ptr.vmem [resolvable:$true] %s221
          %227 = dma.hbm_to_vmem [thread:$0]  %s220, 1024, %s222, %s209, 256, 128, 8
        $region36: #{tpu_custom_call.1} parent=31 // pred_fallthru
          _
      $region32: #{tpu_custom_call.1} parent=5 // pred_fallthru
        _
      %p228 = scmp.le.s32.totalorder 1, %s15
      %p229 = scmp.lt.s32.totalorder %s15, 3
      %p230 = pnand %p228, %p229
      %p231 = pneg %p230
      // Predicated region
      $region37: #{tpu_custom_call.1} parent=5 // pred_check
        _
      $region38: #{tpu_custom_call.1} parent=5 // pred_check_branch
        %233 = sbr.rel (%p230) target = $region40
      $region39: #{tpu_custom_call.1} parent=5 // pred_region
        %s234 = ssub.s32 %s15, 1
        %s235 = sand.u32 %s42, 1
        %s236 = scalar_lea.sflag [#allocation5], %s235
        %s237 = sand.u32 %s42, 1
        %s238 = smul.addr %s237, 64
        %s239 = scalar_lea.vmem [#allocation4], %s238
        // Predicated region
        $region41: #{tpu_custom_call.1} parent=39 // pred_check
          %p240 = pneg %p55
        $region42: #{tpu_custom_call.1} parent=39 // pred_check_branch
          %242 = sbr.rel (%p240) target = $region44
        $region43: #{tpu_custom_call.1} parent=39 // pred_region
          %243 = dma.done %s236, 1024
        $region44: #{tpu_custom_call.1} parent=39 // pred_fallthru
          _
        %s244 = sand.u32 %s42, 1
        %s245 = scalar_lea.sflag [#allocation5], %s244
        %s246 = sand.u32 %s42, 1
        %s247 = smul.addr %s246, 64
        %s248 = scalar_lea.vmem [#allocation4], %s247
        %p249 = pneg %p55
        %p250 = pneg %p52
        %p251 = scmp.lt.s32.totalorder %s24, 0
        %s252 = scalar_select %p251, %s24, 0
        %s253 = smul.addr %s252, 8
        %s254 = scalar_lea.vmem %s1, %s253
        %p255 = pneg %p81
        %p256 = pneg %p78
        %p257 = pneg %p102
        %p258 = pneg %p99
        %p259 = pneg %p123
        %p260 = pneg %p120
        %p261 = pneg %p144
        %p262 = pneg %p141
        %p263 = pneg %p170
        %p264 = pneg %p167
        %s265 = smul.u32 8, %s24
        %p266 = scmp.lt.s32.totalorder %s24, 0
        %s267 = scalar_select %p266, %s24, 0
        %s268 = smul.addr %s267, 8
        %s269 = scalar_lea.vmem %s1, %s268
        %p270 = scmp.eq.s32.totalorder %s25, 0
        // Predicated region
        $region45: #{tpu_custom_call.1} parent=39 // pred_check
          %p271 = pneg %p270
        $region46: #{tpu_custom_call.1} parent=39 // pred_check_branch
          %273 = sbr.rel (%p271) target = $region48
        $region47: #{tpu_custom_call.1} parent=39 // pred_region
          %vm274 = vcmask 7168
          %275 = vst.msk [vmem:[#allocation2] sm:$0xff] %vm274, -inf
          %276 = vst.msk [vmem:[#allocation3] sm:$0xff] %vm274, 0.0
        $region48: #{tpu_custom_call.1} parent=39 // pred_fallthru
          _
        %v277 = vld [vmem:[%s239] sm:$0xff]
        %v278 = vld [vmem:[%s239 + $0x8] sm:$0xff]
        %v279 = vld [vmem:[%s239 + $0x10] sm:$0xff]
        %v280 = vld [vmem:[%s239 + $0x18] sm:$0xff]
        %v281 = vld [vmem:[%s239 + $0x20] sm:$0xff]
        %v282 = vld [vmem:[%s239 + $0x28] sm:$0xff]
        %v283 = vld [vmem:[%s239 + $0x30] sm:$0xff]
        %v284 = vld [vmem:[%s239 + $0x38] sm:$0xff]
        %v285 = vld [vmem:[%s2] sm:$0xff]
        %v286 = vld [vmem:[%s2 + $0x8] sm:$0xff]
        %v287 = vld [vmem:[%s3] sm:$0x1]
        %v289 = vlaneseq
        %v290 = vshrl.u32 %v289, 7
        %v291 = vsub.s32 0, %v290
        %v292 = vrot.slane %v287, %v291
        %vm294 = vcmask 130048
        %v296 = vsel %vm294, %v277, 0
        %v299 = vsel %vm294, %v278, 0
        %v302 = vsel %vm294, %v279, 0
        %v305 = vsel %vm294, %v280, 0
        %v308 = vsel %vm294, %v281, 0
        %v311 = vsel %vm294, %v282, 0
        %v314 = vsel %vm294, %v283, 0
        %v317 = vsel %vm294, %v284, 0
        %319 = vmatprep.subr.mxu0 0.0
        %320 = vmatpush1.msra.mxu0 0.0
        %321 = vmatprep.subr.mxu0 0.0
        %322 = vmatpush1.msra.mxu0 0.0
        %323 = vmatprep.subr.mxu0 0.0
        %324 = vmatpush1.msra.mxu0 0.0
        %325 = vmatprep.subr.mxu0 0.0
        %326 = vmatpush1.msra.mxu0 0.0
        %327 = vmatprep.subr.mxu0 0.0
        %328 = vmatpush1.msra.mxu0 0.0
        %329 = vmatprep.subr.mxu0 0.0
        %330 = vmatpush1.msra.mxu0 0.0
        %331 = vmatprep.subr.mxu0 0.0
        %332 = vmatpush1.msra.mxu0 0.0
        %333 = vmatprep.subr.mxu0 0.0
        %334 = vmatpush1.msra.mxu0 0.0
        %335 = vmatprep.subr.mxu0 0.0
        %336 = vmatpush1.msra.mxu0 0.0
        %337 = vmatprep.subr.mxu0 0.0
        %338 = vmatpush1.msra.mxu0 0.0
        %339 = vmatprep.subr.mxu0 0.0
        %340 = vmatpush1.msra.mxu0 0.0
        %341 = vmatprep.subr.mxu0 0.0
        %342 = vmatpush1.msra.mxu0 0.0
        %343 = vmatprep.subr.mxu0 0.0
        %344 = vmatpush1.msra.mxu0 0.0
        %345 = vmatprep.subr.mxu0 0.0
        %346 = vmatpush1.msra.mxu0 0.0
        %347 = vmatprep.subr.mxu0 0.0
        %348 = vmatpush1.msra.mxu0 %v286
        %349 = vmatprep.subr.mxu0 0.0
        %350 = vmatpush1.msra.mxu0 %v285
        %351 = vmatprep.subr.mxu0 0.0
        %352 = vmatpush2.msra.mxu0 0.0
        %353 = vmatprep.subr.mxu0 0.0
        %354 = vmatpush2.msra.mxu0 0.0
        %355 = vmatprep.subr.mxu0 0.0
        %356 = vmatpush2.msra.mxu0 0.0
        %357 = vmatprep.subr.mxu0 0.0
        %358 = vmatpush2.msra.mxu0 0.0
        %359 = vmatprep.subr.mxu0 0.0
        %360 = vmatpush2.msra.mxu0 0.0
        %361 = vmatprep.subr.mxu0 0.0
        %362 = vmatpush2.msra.mxu0 0.0
        %363 = vmatprep.subr.mxu0 0.0
        %364 = vmatpush2.msra.mxu0 0.0
        %365 = vmatprep.subr.mxu0 0.0
        %366 = vmatpush2.msra.mxu0 0.0
        %367 = vmatprep.subr.mxu0 0.0
        %368 = vmatpush2.msra.mxu0 0.0
        %369 = vmatprep.subr.mxu0 0.0
        %370 = vmatpush2.msra.mxu0 0.0
        %371 = vmatprep.subr.mxu0 0.0
        %372 = vmatpush2.msra.mxu0 0.0
        %373 = vmatprep.subr.mxu0 0.0
        %374 = vmatpush2.msra.mxu0 0.0
        %375 = vmatprep.subr.mxu0 0.0
        %376 = vmatpush2.msra.mxu0 0.0
        %377 = vmatprep.subr.mxu0 0.0
        %378 = vmatpush2.msra.mxu0 0.0
        %379 = vmatprep.subr.mxu0 0.0
        %380 = vmatpush2.msra.mxu0 0.0
        %381 = vmatprep.subr.mxu0 0.0
        %382 = vmatpush2.msra.mxu0 0.0
        %383 = vmatprep.mubr.f32.mxu0 0.0
        %384 = vmatmul.mubr.f32.gmra.mxu0 %v296
        %v385 = vpop.f32.mrf.mxu0
        %v386 = vadd.f32 %v292, %v385
        %v387 = vpop.f32.mrf.mxu0
        %388 = vmatprep.mubr.f32.mxu0 0.0
        %389 = vmatmul.mubr.f32.gmra.mxu0 %v299
        %v390 = vpop.f32.mrf.mxu0
        %v391 = vadd.f32 %v292, %v390
        %v392 = vpop.f32.mrf.mxu0
        %393 = vmatprep.mubr.f32.mxu0 0.0
        %394 = vmatmul.mubr.f32.gmra.mxu0 %v302
        %v395 = vpop.f32.mrf.mxu0
        %v396 = vadd.f32 %v292, %v395
        %v397 = vpop.f32.mrf.mxu0
        %398 = vmatprep.mubr.f32.mxu0 0.0
        %399 = vmatmul.mubr.f32.gmra.mxu0 %v305
        %v400 = vpop.f32.mrf.mxu0
        %v401 = vadd.f32 %v292, %v400
        %v402 = vpop.f32.mrf.mxu0
        %403 = vmatprep.mubr.f32.mxu0 0.0
        %404 = vmatmul.mubr.f32.gmra.mxu0 %v308
        %v405 = vpop.f32.mrf.mxu0
        %v406 = vadd.f32 %v292, %v405
        %v407 = vpop.f32.mrf.mxu0
        %408 = vmatprep.mubr.f32.mxu0 0.0
        %409 = vmatmul.mubr.f32.gmra.mxu0 %v311
        %v410 = vpop.f32.mrf.mxu0
        %v411 = vadd.f32 %v292, %v410
        %v412 = vpop.f32.mrf.mxu0
        %413 = vmatprep.mubr.f32.mxu0 0.0
        %414 = vmatmul.mubr.f32.gmra.mxu0 %v314
        %v415 = vpop.f32.mrf.mxu0
        %v416 = vadd.f32 %v292, %v415
        %v417 = vpop.f32.mrf.mxu0
        %418 = vmatprep.mubr.f32.mxu0 0.0
        %419 = vmatmul.mubr.f32.gmra.mxu0 %v317
        %v420 = vpop.f32.mrf.mxu0
        %v421 = vadd.f32 %v292, %v420
        %v422 = vpop.f32.mrf.mxu0
        %423 = vdwg.mxu0
        %v424 = vtanh.pop %v386
        %v425 = vtanh.pop %v391
        %v426 = vtanh.pop %v396
        %v427 = vtanh.pop %v401
        %v428 = vtanh.pop %v406
        %v429 = vtanh.pop %v411
        %v430 = vtanh.pop %v416
        %v431 = vtanh.pop %v421
        %v432 = vld [vmem:[%s4] sm:$0x1]
        %v434 = vlaneseq
        %v435 = vshrl.u32 %v434, 7
        %v436 = vsub.s32 0, %v435
        %v437 = vrot.slane %v432, %v436
        %v439 = vmul.f32 %v424, %v437
        %v440 = vmul.f32 %v425, %v437
        %v441 = vmul.f32 %v426, %v437
        %v442 = vmul.f32 %v427, %v437
        %v443 = vmul.f32 %v428, %v437
        %v444 = vmul.f32 %v429, %v437
        %v445 = vmul.f32 %v430, %v437
        %v446 = vmul.f32 %v431, %v437
        %vm447 = vcmask 64512
        %v448 = vsel %vm447, %v439, 0.0
        %449 = vadd.xlane.f32.xlu0 %v448
        %v450 = vpop.xlane.xlu0 %449
        %v451 = vsel %vm447, %v440, 0.0
        %452 = vadd.xlane.f32.xlu0 %v451
        %v453 = vpop.xlane.xlu0 %452
        %v454 = vsel %vm447, %v441, 0.0
        %455 = vadd.xlane.f32.xlu0 %v454
        %v456 = vpop.xlane.xlu0 %455
        %v457 = vsel %vm447, %v442, 0.0
        %458 = vadd.xlane.f32.xlu0 %v457
        %v459 = vpop.xlane.xlu0 %458
        %v460 = vsel %vm447, %v443, 0.0
        %461 = vadd.xlane.f32.xlu0 %v460
        %v462 = vpop.xlane.xlu0 %461
        %v463 = vsel %vm447, %v444, 0.0
        %464 = vadd.xlane.f32.xlu0 %v463
        %v465 = vpop.xlane.xlu0 %464
        %v466 = vsel %vm447, %v445, 0.0
        %467 = vadd.xlane.f32.xlu0 %v466
        %v468 = vpop.xlane.xlu0 %467
        %v469 = vsel %vm447, %v446, 0.0
        %470 = vadd.xlane.f32.xlu0 %v469
        %v471 = vpop.xlane.xlu0 %470
        %v472 = vld [vmem:[#allocation2] sm:$0xff]
        %v481 = vlaneseq
        %v482 = vand.u32 %v481, 127
        %v483 = vlaneseq
        %v484 = vshrl.u32 %v483, 7
        %v485 = vsub.s32 %v482, %v484
        %v486 = vrot.slane %v450, %v485
        %v487 = vlaneseq
        %v488 = vshrl.u32 %v487, 7
        %v489 = vsub.s32 %v482, %v488
        %v490 = vrot.slane %v453, %v489
        %v491 = vlaneseq
        %v492 = vshrl.u32 %v491, 7
        %v493 = vsub.s32 %v482, %v492
        %v494 = vrot.slane %v456, %v493
        %v495 = vlaneseq
        %v496 = vshrl.u32 %v495, 7
        %v497 = vsub.s32 %v482, %v496
        %v498 = vrot.slane %v459, %v497
        %v499 = vlaneseq
        %v500 = vshrl.u32 %v499, 7
        %v501 = vsub.s32 %v482, %v500
        %v502 = vrot.slane %v462, %v501
        %v503 = vlaneseq
        %v504 = vshrl.u32 %v503, 7
        %v505 = vsub.s32 %v482, %v504
        %v506 = vrot.slane %v465, %v505
        %v507 = vlaneseq
        %v508 = vshrl.u32 %v507, 7
        %v509 = vsub.s32 %v482, %v508
        %v510 = vrot.slane %v468, %v509
        %v511 = vlaneseq
        %v512 = vshrl.u32 %v511, 7
        %v513 = vsub.s32 %v482, %v512
        %v514 = vrot.slane %v471, %v513
        %vm515 = vcmask 1041409
        %v516 = vsel %vm515, %v490, %v486
        %vm517 = vcmask 1042434
        %v518 = vsel %vm517, %v494, %v516
        %vm519 = vcmask 1043459
        %v520 = vsel %vm519, %v498, %v518
        %vm521 = vcmask 1044484
        %v522 = vsel %vm521, %v502, %v520
        %vm523 = vcmask 1045509
        %v524 = vsel %vm523, %v506, %v522
        %vm525 = vcmask 1046534
        %v526 = vsel %vm525, %v510, %v524
        %vm527 = vcmask 1047559
        %v528 = vsel %vm527, %v514, %v526
        %v530 = vsel %vm447, %v528, -inf
        %531 = vmax.xlane.f32.xlu0 %v530
        %v532 = vpop.xlane.xlu0 %531
        %v533 = vmax.f32 %v472, %v532
        %v534 = vld [vmem:[#allocation3] sm:$0xff]
        %v535 = vsub.f32 %v472, %v533
        %v536 = vmul.f32 %v535, 1.442695
        %v537 = vpow.pop %v536
        %v538 = vmul.f32 %v534, %v537
        %540 = vset.pattern.permute.xlu0 0
        %541 = vperm.xlu0 %540, %v533
        %v542 = vpop.permute.xlu0 %541
        %v543 = vlaneseq
        %v544 = vshrl.u32 %v543, 7
        %v545 = vsub.s32 0, %v544
        %v546 = vrot.slane %v542, %v545
        %v547 = vlaneseq
        %v548 = vshrl.u32 %v547, 7
        %v549 = vsub.s32 1, %v548
        %v550 = vrot.slane %v542, %v549
        %v551 = vlaneseq
        %v552 = vshrl.u32 %v551, 7
        %v553 = vsub.s32 2, %v552
        %v554 = vrot.slane %v542, %v553
        %v555 = vlaneseq
        %v556 = vshrl.u32 %v555, 7
        %v557 = vsub.s32 3, %v556
        %v558 = vrot.slane %v542, %v557
        %v559 = vlaneseq
        %v560 = vshrl.u32 %v559, 7
        %v561 = vsub.s32 4, %v560
        %v562 = vrot.slane %v542, %v561
        %v563 = vlaneseq
        %v564 = vshrl.u32 %v563, 7
        %v565 = vsub.s32 5, %v564
        %v566 = vrot.slane %v542, %v565
        %v567 = vlaneseq
        %v568 = vshrl.u32 %v567, 7
        %v569 = vsub.s32 6, %v568
        %v570 = vrot.slane %v542, %v569
        %v571 = vlaneseq
        %v572 = vshrl.u32 %v571, 7
        %v573 = vsub.s32 7, %v572
        %v574 = vrot.slane %v542, %v573
        %v583 = vsub.f32 %v450, %v546
        %v584 = vsub.f32 %v453, %v550
        %v585 = vsub.f32 %v456, %v554
        %v586 = vsub.f32 %v459, %v558
        %v587 = vsub.f32 %v462, %v562
        %v588 = vsub.f32 %v465, %v566
        %v589 = vsub.f32 %v468, %v570
        %v590 = vsub.f32 %v471, %v574
        %v591 = vmul.f32 %v583, 1.442695
        %v592 = vpow.pop %v591
        %v593 = vmul.f32 %v584, 1.442695
        %v594 = vpow.pop %v593
        %v595 = vmul.f32 %v585, 1.442695
        %v596 = vpow.pop %v595
        %v597 = vmul.f32 %v586, 1.442695
        %v598 = vpow.pop %v597
        %v599 = vmul.f32 %v587, 1.442695
        %v600 = vpow.pop %v599
        %v601 = vmul.f32 %v588, 1.442695
        %v602 = vpow.pop %v601
        %v603 = vmul.f32 %v589, 1.442695
        %v604 = vpow.pop %v603
        %v605 = vmul.f32 %v590, 1.442695
        %v606 = vpow.pop %v605
        %615 = vset.pattern.permute.xlu0 0
        %616 = vperm.xlu0 %615, %v592
        %v617 = vpop.permute.xlu0 %616
        %618 = vset.pattern.permute.xlu0 0
        %619 = vperm.xlu0 %618, %v594
        %v620 = vpop.permute.xlu0 %619
        %621 = vset.pattern.permute.xlu0 0
        %622 = vperm.xlu0 %621, %v596
        %v623 = vpop.permute.xlu0 %622
        %624 = vset.pattern.permute.xlu0 0
        %625 = vperm.xlu0 %624, %v598
        %v626 = vpop.permute.xlu0 %625
        %627 = vset.pattern.permute.xlu0 0
        %628 = vperm.xlu0 %627, %v600
        %v629 = vpop.permute.xlu0 %628
        %630 = vset.pattern.permute.xlu0 0
        %631 = vperm.xlu0 %630, %v602
        %v632 = vpop.permute.xlu0 %631
        %633 = vset.pattern.permute.xlu0 0
        %634 = vperm.xlu0 %633, %v604
        %v635 = vpop.permute.xlu0 %634
        %636 = vset.pattern.permute.xlu0 0
        %637 = vperm.xlu0 %636, %v606
        %v638 = vpop.permute.xlu0 %637
        %v639 = vlaneseq
        %v640 = vshrl.u32 %v639, 7
        %v641 = vsub.s32 %v482, %v640
        %v642 = vrot.slane %v617, %v641
        %v643 = vlaneseq
        %v644 = vshrl.u32 %v643, 7
        %v645 = vsub.s32 %v482, %v644
        %v646 = vrot.slane %v620, %v645
        %v647 = vlaneseq
        %v648 = vshrl.u32 %v647, 7
        %v649 = vsub.s32 %v482, %v648
        %v650 = vrot.slane %v623, %v649
        %v651 = vlaneseq
        %v652 = vshrl.u32 %v651, 7
        %v653 = vsub.s32 %v482, %v652
        %v654 = vrot.slane %v626, %v653
        %v655 = vlaneseq
        %v656 = vshrl.u32 %v655, 7
        %v657 = vsub.s32 %v482, %v656
        %v658 = vrot.slane %v629, %v657
        %v659 = vlaneseq
        %v660 = vshrl.u32 %v659, 7
        %v661 = vsub.s32 %v482, %v660
        %v662 = vrot.slane %v632, %v661
        %v663 = vlaneseq
        %v664 = vshrl.u32 %v663, 7
        %v665 = vsub.s32 %v482, %v664
        %v666 = vrot.slane %v635, %v665
        %v667 = vlaneseq
        %v668 = vshrl.u32 %v667, 7
        %v669 = vsub.s32 %v482, %v668
        %v670 = vrot.slane %v638, %v669
        %v671 = vsel %vm515, %v646, %v642
        %v672 = vsel %vm517, %v650, %v671
        %v673 = vsel %vm519, %v654, %v672
        %v674 = vsel %vm521, %v658, %v673
        %v675 = vsel %vm523, %v662, %v674
        %v676 = vsel %vm525, %v666, %v675
        %v677 = vsel %vm527, %v670, %v676
        %v679 = vsel %vm447, %v677, 0.0
        %680 = vadd.xlane.f32.xlu0 %v679
        %v681 = vpop.xlane.xlu0 %680
        %v682 = vadd.f32 %v538, %v681
        %vm683 = vcmask 7168
        %684 = vst.msk [vmem:[#allocation3] sm:$0xff] %vm683, %v682
        %685 = vst.msk [vmem:[#allocation2] sm:$0xff] %vm683, %v533
        %p686 = scmp.eq.s32.totalorder %s25, 1
        // Predicated region
        $region49: #{tpu_custom_call.1} parent=39 // pred_check
          %p687 = pneg %p686
        $region50: #{tpu_custom_call.1} parent=39 // pred_check_branch
          %689 = sbr.rel (%p687) target = $region52
        $region51: #{tpu_custom_call.1} parent=39 // pred_region
          %v690 = vld [vmem:[#allocation2] sm:$0xff]
          %v692 = vlaneseq
          %v693 = vshrl.u32 %v692, 7
          %v694 = vsub.s32 0, %v693
          %v695 = vrot.slane %v690, %v694
          %s697 = sor.u32 256, 249
          %698 = vbcast.lane.b32.xlu0 %v695, %s697
          %v699 = vpop.permute.xlu0 %698
          %v700 = vlaneseq
          %v701 = vshrl.u32 %v700, 7
          %v702 = vsub.s32 1, %v701
          %v703 = vrot.slane %v690, %v702
          %s705 = sor.u32 256, 249
          %706 = vbcast.lane.b32.xlu0 %v703, %s705
          %v707 = vpop.permute.xlu0 %706
          %v708 = vlaneseq
          %v709 = vshrl.u32 %v708, 7
          %v710 = vsub.s32 2, %v709
          %v711 = vrot.slane %v690, %v710
          %s713 = sor.u32 256, 249
          %714 = vbcast.lane.b32.xlu0 %v711, %s713
          %v715 = vpop.permute.xlu0 %714
          %v716 = vlaneseq
          %v717 = vshrl.u32 %v716, 7
          %v718 = vsub.s32 3, %v717
          %v719 = vrot.slane %v690, %v718
          %s721 = sor.u32 256, 249
          %722 = vbcast.lane.b32.xlu0 %v719, %s721
          %v723 = vpop.permute.xlu0 %722
          %v724 = vlaneseq
          %v725 = vshrl.u32 %v724, 7
          %v726 = vsub.s32 4, %v725
          %v727 = vrot.slane %v690, %v726
          %s729 = sor.u32 256, 249
          %730 = vbcast.lane.b32.xlu0 %v727, %s729
          %v731 = vpop.permute.xlu0 %730
          %v732 = vlaneseq
          %v733 = vshrl.u32 %v732, 7
          %v734 = vsub.s32 5, %v733
          %v735 = vrot.slane %v690, %v734
          %s737 = sor.u32 256, 249
          %738 = vbcast.lane.b32.xlu0 %v735, %s737
          %v739 = vpop.permute.xlu0 %738
          %v740 = vlaneseq
          %v741 = vshrl.u32 %v740, 7
          %v742 = vsub.s32 6, %v741
          %v743 = vrot.slane %v690, %v742
          %s745 = sor.u32 256, 249
          %746 = vbcast.lane.b32.xlu0 %v743, %s745
          %v747 = vpop.permute.xlu0 %746
          %v748 = vlaneseq
          %v749 = vshrl.u32 %v748, 7
          %v750 = vsub.s32 7, %v749
          %v751 = vrot.slane %v690, %v750
          %s753 = sor.u32 256, 249
          %754 = vbcast.lane.b32.xlu0 %v751, %s753
          %v755 = vpop.permute.xlu0 %754
          %v764 = vsub.f32 %v450, %v699
          %v765 = vsub.f32 %v453, %v707
          %v766 = vsub.f32 %v456, %v715
          %v767 = vsub.f32 %v459, %v723
          %v768 = vsub.f32 %v462, %v731
          %v769 = vsub.f32 %v465, %v739
          %v770 = vsub.f32 %v468, %v747
          %v771 = vsub.f32 %v471, %v755
          %v772 = vmul.f32 %v764, 1.442695
          %v773 = vpow.pop %v772
          %v774 = vmul.f32 %v765, 1.442695
          %v775 = vpow.pop %v774
          %v776 = vmul.f32 %v766, 1.442695
          %v777 = vpow.pop %v776
          %v778 = vmul.f32 %v767, 1.442695
          %v779 = vpow.pop %v778
          %v780 = vmul.f32 %v768, 1.442695
          %v781 = vpow.pop %v780
          %v782 = vmul.f32 %v769, 1.442695
          %v783 = vpow.pop %v782
          %v784 = vmul.f32 %v770, 1.442695
          %v785 = vpow.pop %v784
          %v786 = vmul.f32 %v771, 1.442695
          %v787 = vpow.pop %v786
          %v788 = vld [vmem:[#allocation3] sm:$0xff]
          %v789 = vrcp.pop %v788
          %v791 = vlaneseq
          %v792 = vshrl.u32 %v791, 7
          %v793 = vsub.s32 0, %v792
          %v794 = vrot.slane %v789, %v793
          %s796 = sor.u32 256, 249
          %797 = vbcast.lane.b32.xlu0 %v794, %s796
          %v798 = vpop.permute.xlu0 %797
          %v799 = vlaneseq
          %v800 = vshrl.u32 %v799, 7
          %v801 = vsub.s32 1, %v800
          %v802 = vrot.slane %v789, %v801
          %s804 = sor.u32 256, 249
          %805 = vbcast.lane.b32.xlu0 %v802, %s804
          %v806 = vpop.permute.xlu0 %805
          %v807 = vlaneseq
          %v808 = vshrl.u32 %v807, 7
          %v809 = vsub.s32 2, %v808
          %v810 = vrot.slane %v789, %v809
          %s812 = sor.u32 256, 249
          %813 = vbcast.lane.b32.xlu0 %v810, %s812
          %v814 = vpop.permute.xlu0 %813
          %v815 = vlaneseq
          %v816 = vshrl.u32 %v815, 7
          %v817 = vsub.s32 3, %v816
          %v818 = vrot.slane %v789, %v817
          %s820 = sor.u32 256, 249
          %821 = vbcast.lane.b32.xlu0 %v818, %s820
          %v822 = vpop.permute.xlu0 %821
          %v823 = vlaneseq
          %v824 = vshrl.u32 %v823, 7
          %v825 = vsub.s32 4, %v824
          %v826 = vrot.slane %v789, %v825
          %s828 = sor.u32 256, 249
          %829 = vbcast.lane.b32.xlu0 %v826, %s828
          %v830 = vpop.permute.xlu0 %829
          %v831 = vlaneseq
          %v832 = vshrl.u32 %v831, 7
          %v833 = vsub.s32 5, %v832
          %v834 = vrot.slane %v789, %v833
          %s836 = sor.u32 256, 249
          %837 = vbcast.lane.b32.xlu0 %v834, %s836
          %v838 = vpop.permute.xlu0 %837
          %v839 = vlaneseq
          %v840 = vshrl.u32 %v839, 7
          %v841 = vsub.s32 6, %v840
          %v842 = vrot.slane %v789, %v841
          %s844 = sor.u32 256, 249
          %845 = vbcast.lane.b32.xlu0 %v842, %s844
          %v846 = vpop.permute.xlu0 %845
          %v847 = vlaneseq
          %v848 = vshrl.u32 %v847, 7
          %v849 = vsub.s32 7, %v848
          %v850 = vrot.slane %v789, %v849
          %s852 = sor.u32 256, 249
          %853 = vbcast.lane.b32.xlu0 %v850, %s852
          %v854 = vpop.permute.xlu0 %853
          %v863 = vmul.f32 %v773, %v798
          %v864 = vmul.f32 %v775, %v806
          %v865 = vmul.f32 %v777, %v814
          %v866 = vmul.f32 %v779, %v822
          %v867 = vmul.f32 %v781, %v830
          %v868 = vmul.f32 %v783, %v838
          %v869 = vmul.f32 %v785, %v846
          %v870 = vmul.f32 %v787, %v854
          %v871 = vld [vmem:[%s269] sm:$0xff]
          %v872 = vmul.f32 %v277, 16.0
          %v873 = vmul.f32 %v278, 16.0
          %v874 = vmul.f32 %v279, 16.0
          %v875 = vmul.f32 %v280, 16.0
          %v876 = vmul.f32 %v281, 16.0
          %v877 = vmul.f32 %v282, 16.0
          %v878 = vmul.f32 %v283, 16.0
          %v879 = vmul.f32 %v284, 16.0
          %v880 = vlaneseq
          %v881 = vshrl.u32 %v880, 7
          %v882 = vsub.s32 7, %v881
          %v883 = vrot.slane %v863, %v882
          %v884 = vlaneseq
          %v885 = vshrl.u32 %v884, 7
          %v886 = vsub.s32 7, %v885
          %v887 = vrot.slane %v864, %v886
          %v888 = vlaneseq
          %v889 = vshrl.u32 %v888, 7
          %v890 = vsub.s32 7, %v889
          %v891 = vrot.slane %v865, %v890
          %v892 = vlaneseq
          %v893 = vshrl.u32 %v892, 7
          %v894 = vsub.s32 7, %v893
          %v895 = vrot.slane %v866, %v894
          %v896 = vlaneseq
          %v897 = vshrl.u32 %v896, 7
          %v898 = vsub.s32 7, %v897
          %v899 = vrot.slane %v867, %v898
          %v900 = vlaneseq
          %v901 = vshrl.u32 %v900, 7
          %v902 = vsub.s32 7, %v901
          %v903 = vrot.slane %v868, %v902
          %v904 = vlaneseq
          %v905 = vshrl.u32 %v904, 7
          %v906 = vsub.s32 7, %v905
          %v907 = vrot.slane %v869, %v906
          %v908 = vlaneseq
          %v909 = vshrl.u32 %v908, 7
          %v910 = vsub.s32 7, %v909
          %v911 = vrot.slane %v870, %v910
          %920 = vset.pattern.permute.xlu0 0
          %921 = vperm.xlu0 %920, %v883
          %v922 = vpop.permute.xlu0 %921
          %923 = vset.pattern.permute.xlu0 0
          %924 = vperm.xlu0 %923, %v887
          %v925 = vpop.permute.xlu0 %924
          %926 = vset.pattern.permute.xlu0 0
          %927 = vperm.xlu0 %926, %v891
          %v928 = vpop.permute.xlu0 %927
          %929 = vset.pattern.permute.xlu0 0
          %930 = vperm.xlu0 %929, %v895
          %v931 = vpop.permute.xlu0 %930
          %932 = vset.pattern.permute.xlu0 0
          %933 = vperm.xlu0 %932, %v899
          %v934 = vpop.permute.xlu0 %933
          %935 = vset.pattern.permute.xlu0 0
          %936 = vperm.xlu0 %935, %v903
          %v937 = vpop.permute.xlu0 %936
          %938 = vset.pattern.permute.xlu0 0
          %939 = vperm.xlu0 %938, %v907
          %v940 = vpop.permute.xlu0 %939
          %941 = vset.pattern.permute.xlu0 0
          %942 = vperm.xlu0 %941, %v911
          %v943 = vpop.permute.xlu0 %942
          %v952 = vmul.f32 %v872, %v922
          %v953 = vmul.f32 %v873, %v925
          %v954 = vmul.f32 %v874, %v928
          %v955 = vmul.f32 %v875, %v931
          %v956 = vmul.f32 %v876, %v934
          %v957 = vmul.f32 %v877, %v937
          %v958 = vmul.f32 %v878, %v940
          %v959 = vmul.f32 %v879, %v943
          %v968 = vrot.slane %v952, 7
          %v969 = vrot.slane %v953, 6
          %v970 = vsel %vm515, %v969, %v968
          %v971 = vrot.slane %v954, 5
          %v972 = vsel %vm517, %v971, %v970
          %v973 = vrot.slane %v955, 4
          %v974 = vsel %vm519, %v973, %v972
          %v975 = vrot.slane %v956, 3
          %v976 = vsel %vm521, %v975, %v974
          %v977 = vrot.slane %v957, 2
          %v978 = vsel %vm523, %v977, %v976
          %v979 = vrot.slane %v958, 1
          %v980 = vsel %vm525, %v979, %v978
          %v981 = vsel %vm527, %v959, %v980
          %v983 = vadd.f32 %v871, %v981
          %984 = vst.msk [vmem:[#allocation7] sm:$0xff] %vm294, %v983
        $region52: #{tpu_custom_call.1} parent=39 // pred_fallthru
          _
        // Predicated region
        $region53: #{tpu_custom_call.1} parent=39 // pred_check
          %p985 = pneg %p167
        $region54: #{tpu_custom_call.1} parent=39 // pred_check_branch
          %987 = sbr.rel (%p985) target = $region56
        $region55: #{tpu_custom_call.1} parent=39 // pred_region
          %s989 = ssub.s32 128, 128
          %990 = vsyncadd [#allocation6], %s989
          %s991 = smul.addr %s24, 128
          %s992 = scalar_lea.hbm %s5, %s991
          %s994 = sshll.u32 [#allocation7], 4
          %s995 = int_to_ptr.vmem [resolvable:$true] %s994
          %997 = dma.vmem_to_hbm [thread:$0]  %s995, 128, %s992, [#allocation6]
        $region56: #{tpu_custom_call.1} parent=39 // pred_fallthru
          _
        // Predicated region
        $region57: #{tpu_custom_call.1} parent=39 // pred_check
          %p998 = pneg %p167
        $region58: #{tpu_custom_call.1} parent=39 // pred_check_branch
          %1000 = sbr.rel (%p998) target = $region60
        $region59: #{tpu_custom_call.1} parent=39 // pred_region
          %1001 = dma.done [#allocation6], 128
        $region60: #{tpu_custom_call.1} parent=39 // pred_fallthru
          _
      $region40: #{tpu_custom_call.1} parent=5 // pred_fallthru
        _
      %p1002 = scmp.le.s32.totalorder 2, %s15
      // Predicated region
      $region61: #{tpu_custom_call.1} parent=5 // pred_check
        %p1003 = pneg %p1002
      $region62: #{tpu_custom_call.1} parent=5 // pred_check_branch
        %1005 = sbr.rel (%p1003) target = $region64
      $region63: #{tpu_custom_call.1} parent=5 // pred_region
        %s1006 = ssub.s32 %s15, 2
      $region64: #{tpu_custom_call.1} parent=5 // pred_fallthru
        _
    $region6: #{tpu_custom_call.1} parent=1 // loop_footer
      %s19 = sadd.s32 1, %s15
    $region7: #{tpu_custom_call.1} parent=1 // loop_footer_branch
      %14 = sbr.rel target = $region3
    $region8: #{tpu_custom_call.1} parent=1 // loop_exit
      _
    %1007 = vsyncpa [#allocation5], 1
    %s1008 = scalar_lea.sflag [#allocation5], 1
    %1009 = vsyncpa %s1008, 1
    %1010 = vsyncpa [#allocation6], 1
    %s1011 = scalar_lea.sflag [#allocation6], 1
    %1012 = vsyncpa %s1011, 1

</llo_original>
